<compile_context>
chip_gen: v5e
topology: v5e:2x2
jax: 0.10.0
libtpu: 0.0.40
codegen_flags: <defaults>
</compile_context>

<pallas_src>
import jax
import jax.numpy as jnp
from jax.experimental import pallas as pl
from jax.experimental.pallas import tpu as pltpu

INPUT_DIM = 32
DIMS = (64, 48)
BATCH_NORM = (True, False)
ACT = ("ReLU", "Tanh")
OUTPUT_SIZE = 16
BN_EPS = 1e-5

MAX_TM = 8192     # rows per tile (per-step VMEM ~0.9 KB/row incl. intermediates)
MIN_TILES = 4     # aim for >=4 grid steps: megacore sharding + pipeline overlap


def _mlp_kernel(x_ref, w1_ref, b1_ref, w2_ref, b2_ref, w3_ref, b3_ref, o_ref):
    """Fused 3-matmul MLP on one (TM, 32) row tile. BN is pre-folded into W1/b1.

    Matmul operands are bf16 (MXU-friendly); accumulation and bias/activation
    math are f32; output is stored bf16.
    """
    x = x_ref[...]                                              # (TM, 32) bf16

    # Linear(32 -> 64) [BN folded in] + ReLU
    h = jnp.dot(x, w1_ref[...], preferred_element_type=jnp.float32) + b1_ref[...]
    h = jnp.maximum(h, 0.0).astype(jnp.bfloat16)

    # Linear(64 -> 48) + Tanh  (tanh in f32 on the EUP)
    h = jnp.dot(h, w2_ref[...], preferred_element_type=jnp.float32) + b2_ref[...]
    h = jnp.tanh(h).astype(jnp.bfloat16)

    # Output Linear(48 -> 16); bf16 store halves vst count / writeback.
    o_ref[...] = (jnp.dot(h, w3_ref[...], preferred_element_type=jnp.float32)
                  + b3_ref[...]).astype(o_ref.dtype)


def _choose_tm(m):
    """Row-tile size: multiple of 16 (bf16 sublane tile), <= MAX_TM, and sized
    so that large M gets at least MIN_TILES grid steps."""
    n_tiles = max(MIN_TILES, pl.cdiv(m, MAX_TM))
    tm = pl.cdiv(m, n_tiles)
    tm = pl.cdiv(tm, 16) * 16
    return max(16, min(tm, MAX_TM))


def _const_spec(shape):
    """Full-array block that stays resident across the row grid."""
    return pl.BlockSpec(shape, lambda i: tuple(0 for _ in shape))


@jax.jit
def linear_forward(X, X_len, params):
    """Mirrors Linear.forward: returns (logits, None)."""
    del X_len  # unused, same as the PyTorch forward
    N, T, C = X.shape
    M = N * T
    x_f32 = X.reshape(M, C).astype(jnp.float32)

    bn_g, bn_b, w1, b1, w2, b2, w3, b3 = params

    # --- Fold training-mode BatchNorm1d into the first Linear ----------------
    # One fused pass over X: mean and E[x^2]; biased var = E[x^2] - mean^2
    # (clamped at 0 against cancellation) matches PyTorch train-mode BN.
    mean = jnp.mean(x_f32, axis=0, keepdims=True)                     # (1, C)
    ex2 = jnp.mean(x_f32 * x_f32, axis=0, keepdims=True)              # (1, C)
    var = jnp.maximum(ex2 - mean * mean, 0.0)
    scale = bn_g * jax.lax.rsqrt(var + BN_EPS)                        # (1, C)
    shift = bn_b - mean * scale                                       # (1, C)
    w1f = w1 * scale.reshape(C, 1)                                    # diag(scale) @ W1
    b1f = shift @ w1 + b1                                             # (1, D1) f32

    # --- bf16 MXU operands (f32 accumulation happens inside the kernel) ------
    x_bf = x_f32.astype(jnp.bfloat16)
    w1_bf = w1f.astype(jnp.bfloat16)
    w2_bf = w2.astype(jnp.bfloat16)
    w3_bf = w3.astype(jnp.bfloat16)

    # --- Row tiling: pad M to a multiple of TM only if needed ----------------
    TM = _choose_tm(M)
    n_tiles = pl.cdiv(M, TM)
    M_pad = n_tiles * TM
    if M_pad != M:
        x_bf = jnp.pad(x_bf, ((0, M_pad - M), (0, 0)))

    in_specs = [
        pl.BlockSpec((TM, C), lambda i: (i, 0)),            # x: streamed per tile
        _const_spec(w1_bf.shape), _const_spec(b1f.shape),   # weights stay resident
        _const_spec(w2_bf.shape), _const_spec(b2.shape),
        _const_spec(w3_bf.shape), _const_spec(b3.shape),
    ]
    out_spec = pl.BlockSpec((TM, OUTPUT_SIZE), lambda i: (i, 0))

    out = pl.pallas_call(
        _mlp_kernel,
        out_shape=jax.ShapeDtypeStruct((M_pad, OUTPUT_SIZE), jnp.bfloat16),
        grid=(n_tiles,),
        in_specs=in_specs,
        out_specs=out_spec,
        compiler_params=pltpu.CompilerParams(
            dimension_semantics=("parallel",),   # shard row tiles across v7x's 2 TCs
        ),
    )(x_bf, w1_bf, b1f, w2_bf, b2, w3_bf, b3)

    logits = out[:M].astype(jnp.float32).reshape(N, T, OUTPUT_SIZE)
    return logits, None


def _reference(X, params):
    """Pure-JAX f32 reference of the PyTorch forward (train-mode BN, biased var)."""
    N, T, C = X.shape
    x = X.reshape(N * T, C).astype(jnp.float32)
    bn_g, bn_b, w1, b1, w2, b2, w3, b3 = params
    mean = jnp.mean(x, axis=0, keepdims=True)
    var = jnp.mean(jnp.square(x - mean), axis=0, keepdims=True)
    x = (x - mean) * jax.lax.rsqrt(var + BN_EPS) * bn_g + bn_b
    h = jnp.maximum(x @ w1 + b1, 0.0)
    h = jnp.tanh(h @ w2 + b2)
    out = h @ w3 + b3
    return out.reshape(N, T, OUTPUT_SIZE)


def init_params(key):
    """Deterministic parameter init (weights stored as (in, out))."""
    ks = jax.random.split(key, 6)

    def lin(kw, kb, fan_in, fan_out):
        bound = 1.0 / jnp.sqrt(fan_in)
        w = jax.random.uniform(kw, (fan_in, fan_out), jnp.float32, -bound, bound)
        b = jax.random.uniform(kb, (1, fan_out), jnp.float32, -bound, bound)
        return w, b

    bn_g = jnp.ones((1, INPUT_DIM), jnp.float32)
    bn_b = jnp.zeros((1, INPUT_DIM), jnp.float32)
    w1, b1 = lin(ks[0], ks[1], INPUT_DIM, DIMS[0])
    w2, b2 = lin(ks[2], ks[3], DIMS[0], DIMS[1])
    w3, b3 = lin(ks[4], ks[5], DIMS[1], OUTPUT_SIZE)
    return (bn_g, bn_b, w1, b1, w2, b2, w3, b3)


if __name__ == "__main__":
    key = jax.random.PRNGKey(0)
    k_x, k_p = jax.random.split(key)

    # Small shapes; M = N*T = 64 rows -> 4 row tiles of 16 (exercises the grid).
    N, T, C = 4, 16, INPUT_DIM
    X = jax.random.normal(k_x, (N, T, C), jnp.float32)
    X_len = jnp.full((N,), T, jnp.int32)   # accepted but unused, like PyTorch

    params = init_params(k_p)

    logits, aux = linear_forward(X, X_len, params)
    logits = jax.block_until_ready(logits)
    assert logits.shape == (N, T, OUTPUT_SIZE)
    assert aux is None

    ref = _reference(X, params)
    # bf16 matmul operands + bf16 output store => looser tolerance vs f32 reference.
    assert jnp.allclose(logits, ref, rtol=3e-2, atol=3e-2), "mismatch vs JAX reference"

    # Ragged row count -> exercises the zero-padding / partial-tile path.
    N2, T2 = 3, 7
    X2 = jax.random.normal(jax.random.PRNGKey(1), (N2, T2, C), jnp.float32)
    X2_len = jnp.full((N2,), T2, jnp.int32)
    logits2, _ = linear_forward(X2, X2_len, params)
    logits2 = jax.block_until_ready(logits2)
    ref2 = _reference(X2, params)
    assert jnp.allclose(logits2, ref2, rtol=3e-2, atol=3e-2), "mismatch (padded path)"

    print("KERNEL_OK")
</pallas_src>

<mosaic_0001>
module attributes {stable_mosaic.version = 11 : i64} {
  func.func @_mlp_kernel(%arg0: i32, %arg1: memref<16x32xbf16, #tpu.memory_space<vmem>>, %arg2: memref<32x64xbf16, #tpu.memory_space<vmem>>, %arg3: memref<1x64xf32, #tpu.memory_space<vmem>>, %arg4: memref<64x48xbf16, #tpu.memory_space<vmem>>, %arg5: memref<1x48xf32, #tpu.memory_space<vmem>>, %arg6: memref<48x16xbf16, #tpu.memory_space<vmem>>, %arg7: memref<1x16xf32, #tpu.memory_space<vmem>>, %arg8: memref<16x16xbf16, #tpu.memory_space<vmem>>) attributes {dimension_semantics = [#tpu.dimension_semantics<parallel>], iteration_bounds = array<i64: 4>, scalar_prefetch = 0 : i64, scratch_operands = 0 : i64, tpu.core_type = #tpu.core_type<tc>, window_params = [{transform_indices = @transform_0, window_bounds = array<i64: 16, 32>}, {pipeline_mode = #tpu.pipeline_mode<synchronous>, transform_indices = @transform_1, window_bounds = array<i64: 32, 64>}, {pipeline_mode = #tpu.pipeline_mode<synchronous>, transform_indices = @transform_2, window_bounds = array<i64: 1, 64>}, {pipeline_mode = #tpu.pipeline_mode<synchronous>, transform_indices = @transform_3, window_bounds = array<i64: 64, 48>}, {pipeline_mode = #tpu.pipeline_mode<synchronous>, transform_indices = @transform_4, window_bounds = array<i64: 1, 48>}, {pipeline_mode = #tpu.pipeline_mode<synchronous>, transform_indices = @transform_5, window_bounds = array<i64: 48, 16>}, {pipeline_mode = #tpu.pipeline_mode<synchronous>, transform_indices = @transform_6, window_bounds = array<i64: 1, 16>}, {transform_indices = @transform_7, window_bounds = array<i64: 16, 16>}]} {
    %c0 = arith.constant 0 : index
    %c0_0 = arith.constant 0 : index
    %0 = vector.load %arg1[%c0, %c0_0] : memref<16x32xbf16, #tpu.memory_space<vmem>>, vector<16x32xbf16>
    %c0_1 = arith.constant 0 : index
    %c0_2 = arith.constant 0 : index
    %1 = vector.load %arg2[%c0_1, %c0_2] : memref<32x64xbf16, #tpu.memory_space<vmem>>, vector<32x64xbf16>
    %cst = arith.constant dense<0.000000e+00> : vector<16x64xf32>
    %2 = tpu.matmul %0, %1, %cst {dimension_numbers = #tpu.dot_dimension_numbers<[1], [0], [0], [1], [0, 0, 1, 1], [], []>} : vector<16x32xbf16>, vector<32x64xbf16>, vector<16x64xf32> -> vector<16x64xf32>
    %c0_3 = arith.constant 0 : index
    %c0_4 = arith.constant 0 : index
    %3 = vector.load %arg3[%c0_3, %c0_4] : memref<1x64xf32, #tpu.memory_space<vmem>>, vector<1x64xf32>
    %4 = vector.broadcast %3 : vector<1x64xf32> to vector<16x64xf32>
    %5 = arith.addf %2, %4 : vector<16x64xf32>
    %cst_5 = arith.constant 0.000000e+00 : f32
    %6 = vector.broadcast %cst_5 : f32 to vector<16x64xf32>
    %7 = arith.maximumf %5, %6 : vector<16x64xf32>
    %8 = arith.truncf %7 : vector<16x64xf32> to vector<16x64xbf16>
    %c0_6 = arith.constant 0 : index
    %c0_7 = arith.constant 0 : index
    %9 = vector.load %arg4[%c0_6, %c0_7] : memref<64x48xbf16, #tpu.memory_space<vmem>>, vector<64x48xbf16>
    %cst_8 = arith.constant dense<0.000000e+00> : vector<16x48xf32>
    %10 = tpu.matmul %8, %9, %cst_8 {dimension_numbers = #tpu.dot_dimension_numbers<[1], [0], [0], [1], [0, 0, 1, 1], [], []>} : vector<16x64xbf16>, vector<64x48xbf16>, vector<16x48xf32> -> vector<16x48xf32>
    %c0_9 = arith.constant 0 : index
    %c0_10 = arith.constant 0 : index
    %11 = vector.load %arg5[%c0_9, %c0_10] : memref<1x48xf32, #tpu.memory_space<vmem>>, vector<1x48xf32>
    %12 = vector.broadcast %11 : vector<1x48xf32> to vector<16x48xf32>
    %13 = arith.addf %10, %12 : vector<16x48xf32>
    %14 = math.tanh %13 : vector<16x48xf32>
    %15 = arith.truncf %14 : vector<16x48xf32> to vector<16x48xbf16>
    %c0_11 = arith.constant 0 : index
    %c0_12 = arith.constant 0 : index
    %16 = vector.load %arg6[%c0_11, %c0_12] : memref<48x16xbf16, #tpu.memory_space<vmem>>, vector<48x16xbf16>
    %cst_13 = arith.constant dense<0.000000e+00> : vector<16x16xf32>
    %17 = tpu.matmul %15, %16, %cst_13 {dimension_numbers = #tpu.dot_dimension_numbers<[1], [0], [0], [1], [0, 0, 1, 1], [], []>} : vector<16x48xbf16>, vector<48x16xbf16>, vector<16x16xf32> -> vector<16x16xf32>
    %c0_14 = arith.constant 0 : index
    %c0_15 = arith.constant 0 : index
    %18 = vector.load %arg7[%c0_14, %c0_15] : memref<1x16xf32, #tpu.memory_space<vmem>>, vector<1x16xf32>
    %19 = vector.broadcast %18 : vector<1x16xf32> to vector<16x16xf32>
    %20 = arith.addf %17, %19 : vector<16x16xf32>
    %21 = arith.truncf %20 : vector<16x16xf32> to vector<16x16xbf16>
    %c0_16 = arith.constant 0 : index
    %c0_17 = arith.constant 0 : index
    %22 = vector.load %arg8[%c0_16, %c0_17] : memref<16x16xbf16, #tpu.memory_space<vmem>>, vector<16x16xbf16>
    tpu.vector_store %arg8[%c0_16, %c0_17], %21 {strides = array<i32>} : memref<16x16xbf16, #tpu.memory_space<vmem>>, vector<16x16xbf16>,
    return
  }
  func.func @transform_0(%arg0: i32) -> (i32, i32) {
    %c0_i32 = arith.constant 0 : i32
    %c0_i32_0 = arith.constant 0 : i32
    return %arg0, %c0_i32 : i32, i32
  }
  func.func @transform_1(%arg0: i32) -> (i32, i32) {
    %c0_i32 = arith.constant 0 : i32
    %c0_i32_0 = arith.constant 0 : i32
    %c0_i32_1 = arith.constant 0 : i32
    return %c0_i32, %c0_i32_0 : i32, i32
  }
  func.func @transform_2(%arg0: i32) -> (i32, i32) {
    %c0_i32 = arith.constant 0 : i32
    %c0_i32_0 = arith.constant 0 : i32
    %c0_i32_1 = arith.constant 0 : i32
    return %c0_i32, %c0_i32_0 : i32, i32
  }
  func.func @transform_3(%arg0: i32) -> (i32, i32) {
    %c0_i32 = arith.constant 0 : i32
    %c0_i32_0 = arith.constant 0 : i32
    %c0_i32_1 = arith.constant 0 : i32
    return %c0_i32, %c0_i32_0 : i32, i32
  }
  func.func @transform_4(%arg0: i32) -> (i32, i32) {
    %c0_i32 = arith.constant 0 : i32
    %c0_i32_0 = arith.constant 0 : i32
    %c0_i32_1 = arith.constant 0 : i32
    return %c0_i32, %c0_i32_0 : i32, i32
  }
  func.func @transform_5(%arg0: i32) -> (i32, i32) {
    %c0_i32 = arith.constant 0 : i32
    %c0_i32_0 = arith.constant 0 : i32
    %c0_i32_1 = arith.constant 0 : i32
    return %c0_i32, %c0_i32_0 : i32, i32
  }
  func.func @transform_6(%arg0: i32) -> (i32, i32) {
    %c0_i32 = arith.constant 0 : i32
    %c0_i32_0 = arith.constant 0 : i32
    %c0_i32_1 = arith.constant 0 : i32
    return %c0_i32, %c0_i32_0 : i32, i32
  }
  func.func @transform_7(%arg0: i32) -> (i32, i32) {
    %c0_i32 = arith.constant 0 : i32
    %c0_i32_0 = arith.constant 0 : i32
    return %arg0, %c0_i32 : i32, i32
  }
}

</mosaic_0001>

<llo_original>
// kernel: linear_forward.1
$region0: #{linear_forward.1}
  #allocation0 [shape = 'u32[]', space=smem, size = 0x4, offset = 0x4, fixed_abs, tag = 'smem constant byte address 0x4 - core index']
  #allocation1 [shape = 'u32[72,128]{1,0:T(1,128)}', space=vmem, size = 0x9000, scoped, tag = 'internal scratch']
  %s0 = inlined_call_operand.vmem [shape: bf16[64,32], index: 0, kind: input, shape index: {}]
  %s1 = inlined_call_operand.vmem [shape: bf16[32,64], index: 1, kind: input, shape index: {}]
  %s2 = inlined_call_operand.vmem [shape: f32[1,64], index: 2, kind: input, shape index: {}]
  %s3 = inlined_call_operand.vmem [shape: bf16[64,48], index: 3, kind: input, shape index: {}]
  %s4 = inlined_call_operand.vmem [shape: f32[1,48], index: 4, kind: input, shape index: {}]
  %s5 = inlined_call_operand.vmem [shape: bf16[48,16], index: 5, kind: input, shape index: {}]
  %s6 = inlined_call_operand.vmem [shape: f32[1,16], index: 6, kind: input, shape index: {}]
  %s7 = inlined_call_operand.vmem [shape: bf16[64,16], index: 7, kind: output, shape index: {}]
  %s8 = sld [smem:[#allocation0]]
  $region61: #{linear_forward.1} parent=0
    _
  %s10 = ssub.s32 1, %s8
  %s11 = scalar_select 0, %s10, %s8
  loop: start=0, step=1, limit=6
  $region2: #{linear_forward.1} parent=0 // loop_pre_header
    _
  $region3: #{linear_forward.1} parent=0 // loop_header
    %s13 = sphi 0, %s17
    %p14 = scmp.ge.s32.totalorder %s13, 6
    %s23 = sphi 0, %s25
    %s26 = sphi 0, %s23
    %s27 = sphi 0, %s26
    %s43 = sphi 0, %s27
    %s47 = sphi 0, %s47
    %s49 = sphi 0, %s47
    %s50 = sphi 0, %s49
    %s64 = sphi 0, %s50
    %s68 = sphi 0, %s68
    %s70 = sphi 0, %s68
    %s71 = sphi 0, %s70
    %s85 = sphi 0, %s71
    %s89 = sphi 0, %s89
    %s91 = sphi 0, %s89
    %s92 = sphi 0, %s91
    %s106 = sphi 0, %s92
    %s110 = sphi 0, %s110
    %s112 = sphi 0, %s110
    %s113 = sphi 0, %s112
    %s127 = sphi 0, %s113
    %s131 = sphi 0, %s131
    %s133 = sphi 0, %s131
    %s134 = sphi 0, %s133
    %s148 = sphi 0, %s134
    %s152 = sphi 0, %s152
    %s154 = sphi 0, %s152
    %s155 = sphi 0, %s154
    %s169 = sphi 0, %s155
    %s175 = sphi 0, %s177
    %s178 = sphi 0, %s175
    %s179 = sphi 0, %s178
    %s195 = sphi 0, %s179
  $region4: #{linear_forward.1} parent=0 // loop_header_branch
    %16 = sbr.rel (%p14) target = $region8
  $region5: #{linear_forward.1} parent=0 // loop_body
    %s18 = ssub.s32 %s13, 1
    %s19 = ssub.s32 %s13, 2
    %s20 = sadd.s32 %s13, 1
    %s21 = ssub.s32 %s13, %s20
    %p22 = scmp.eq.s32.totalorder %s21, 0
    %s24 = sadd.s32 %s23, 1
    %s25 = scalar_select %p22, %s23, %s24
    %p28 = pneg %p22
    %p29 = scmp.eq.s32.totalorder %s13, 3
    %p30 = por %p28, %p29
    %p31 = scmp.ne.s32.totalorder %s23, %s26
    %p32 = scmp.eq.s32.totalorder %s13, 0
    %p33 = por %p31, %p32
    %p34 = scmp.ne.s32.totalorder %s23, %s26
    %p35 = scmp.eq.s32.totalorder %s18, 3
    %p36 = por %p34, %p35
    %p37 = scmp.ne.s32.totalorder %s26, %s27
    %p38 = scmp.eq.s32.totalorder %s18, 0
    %p39 = por %p37, %p38
    %p40 = scmp.ne.s32.totalorder %s26, %s27
    %p41 = scmp.eq.s32.totalorder %s19, 3
    %p42 = por %p40, %p41
    %p44 = scmp.ne.s32.totalorder %s27, %s43
    %p45 = scmp.eq.s32.totalorder %s19, 0
    %p46 = por %p44, %p45
    %s48 = sadd.s32 %s47, 1
    %p51 = scmp.eq.s32.totalorder %s13, 3
    %p52 = scmp.ne.s32.totalorder %s47, %s49
    %p53 = scmp.eq.s32.totalorder %s13, 0
    %p54 = por %p52, %p53
    %p55 = scmp.ne.s32.totalorder %s47, %s49
    %p56 = scmp.eq.s32.totalorder %s18, 3
    %p57 = por %p55, %p56
    %p58 = scmp.ne.s32.totalorder %s49, %s50
    %p59 = scmp.eq.s32.totalorder %s18, 0
    %p60 = por %p58, %p59
    %p61 = scmp.ne.s32.totalorder %s49, %s50
    %p62 = scmp.eq.s32.totalorder %s19, 3
    %p63 = por %p61, %p62
    %p65 = scmp.ne.s32.totalorder %s50, %s64
    %p66 = scmp.eq.s32.totalorder %s19, 0
    %p67 = por %p65, %p66
    %s69 = sadd.s32 %s68, 1
    %p72 = scmp.eq.s32.totalorder %s13, 3
    %p73 = scmp.ne.s32.totalorder %s68, %s70
    %p74 = scmp.eq.s32.totalorder %s13, 0
    %p75 = por %p73, %p74
    %p76 = scmp.ne.s32.totalorder %s68, %s70
    %p77 = scmp.eq.s32.totalorder %s18, 3
    %p78 = por %p76, %p77
    %p79 = scmp.ne.s32.totalorder %s70, %s71
    %p80 = scmp.eq.s32.totalorder %s18, 0
    %p81 = por %p79, %p80
    %p82 = scmp.ne.s32.totalorder %s70, %s71
    %p83 = scmp.eq.s32.totalorder %s19, 3
    %p84 = por %p82, %p83
    %p86 = scmp.ne.s32.totalorder %s71, %s85
    %p87 = scmp.eq.s32.totalorder %s19, 0
    %p88 = por %p86, %p87
    %s90 = sadd.s32 %s89, 1
    %p93 = scmp.eq.s32.totalorder %s13, 3
    %p94 = scmp.ne.s32.totalorder %s89, %s91
    %p95 = scmp.eq.s32.totalorder %s13, 0
    %p96 = por %p94, %p95
    %p97 = scmp.ne.s32.totalorder %s89, %s91
    %p98 = scmp.eq.s32.totalorder %s18, 3
    %p99 = por %p97, %p98
    %p100 = scmp.ne.s32.totalorder %s91, %s92
    %p101 = scmp.eq.s32.totalorder %s18, 0
    %p102 = por %p100, %p101
    %p103 = scmp.ne.s32.totalorder %s91, %s92
    %p104 = scmp.eq.s32.totalorder %s19, 3
    %p105 = por %p103, %p104
    %p107 = scmp.ne.s32.totalorder %s92, %s106
    %p108 = scmp.eq.s32.totalorder %s19, 0
    %p109 = por %p107, %p108
    %s111 = sadd.s32 %s110, 1
    %p114 = scmp.eq.s32.totalorder %s13, 3
    %p115 = scmp.ne.s32.totalorder %s110, %s112
    %p116 = scmp.eq.s32.totalorder %s13, 0
    %p117 = por %p115, %p116
    %p118 = scmp.ne.s32.totalorder %s110, %s112
    %p119 = scmp.eq.s32.totalorder %s18, 3
    %p120 = por %p118, %p119
    %p121 = scmp.ne.s32.totalorder %s112, %s113
    %p122 = scmp.eq.s32.totalorder %s18, 0
    %p123 = por %p121, %p122
    %p124 = scmp.ne.s32.totalorder %s112, %s113
    %p125 = scmp.eq.s32.totalorder %s19, 3
    %p126 = por %p124, %p125
    %p128 = scmp.ne.s32.totalorder %s113, %s127
    %p129 = scmp.eq.s32.totalorder %s19, 0
    %p130 = por %p128, %p129
    %s132 = sadd.s32 %s131, 1
    %p135 = scmp.eq.s32.totalorder %s13, 3
    %p136 = scmp.ne.s32.totalorder %s131, %s133
    %p137 = scmp.eq.s32.totalorder %s13, 0
    %p138 = por %p136, %p137
    %p139 = scmp.ne.s32.totalorder %s131, %s133
    %p140 = scmp.eq.s32.totalorder %s18, 3
    %p141 = por %p139, %p140
    %p142 = scmp.ne.s32.totalorder %s133, %s134
    %p143 = scmp.eq.s32.totalorder %s18, 0
    %p144 = por %p142, %p143
    %p145 = scmp.ne.s32.totalorder %s133, %s134
    %p146 = scmp.eq.s32.totalorder %s19, 3
    %p147 = por %p145, %p146
    %p149 = scmp.ne.s32.totalorder %s134, %s148
    %p150 = scmp.eq.s32.totalorder %s19, 0
    %p151 = por %p149, %p150
    %s153 = sadd.s32 %s152, 1
    %p156 = scmp.eq.s32.totalorder %s13, 3
    %p157 = scmp.ne.s32.totalorder %s152, %s154
    %p158 = scmp.eq.s32.totalorder %s13, 0
    %p159 = por %p157, %p158
    %p160 = scmp.ne.s32.totalorder %s152, %s154
    %p161 = scmp.eq.s32.totalorder %s18, 3
    %p162 = por %p160, %p161
    %p163 = scmp.ne.s32.totalorder %s154, %s155
    %p164 = scmp.eq.s32.totalorder %s18, 0
    %p165 = por %p163, %p164
    %p166 = scmp.ne.s32.totalorder %s154, %s155
    %p167 = scmp.eq.s32.totalorder %s19, 3
    %p168 = por %p166, %p167
    %p170 = scmp.ne.s32.totalorder %s155, %s169
    %p171 = scmp.eq.s32.totalorder %s19, 0
    %p172 = por %p170, %p171
    %s173 = ssub.s32 %s13, %s20
    %p174 = scmp.eq.s32.totalorder %s173, 0
    %s176 = sadd.s32 %s175, 1
    %s177 = scalar_select %p174, %s175, %s176
    %p180 = pneg %p174
    %p181 = scmp.eq.s32.totalorder %s13, 3
    %p182 = por %p180, %p181
    %p183 = scmp.ne.s32.totalorder %s175, %s178
    %p184 = scmp.eq.s32.totalorder %s13, 0
    %p185 = por %p183, %p184
    %p186 = scmp.ne.s32.totalorder %s175, %s178
    %p187 = scmp.eq.s32.totalorder %s18, 3
    %p188 = por %p186, %p187
    %p189 = scmp.ne.s32.totalorder %s178, %s179
    %p190 = scmp.eq.s32.totalorder %s18, 0
    %p191 = por %p189, %p190
    %p192 = scmp.ne.s32.totalorder %s178, %s179
    %p193 = scmp.eq.s32.totalorder %s19, 3
    %p194 = por %p192, %p193
    %p196 = scmp.ne.s32.totalorder %s179, %s195
    %p197 = scmp.eq.s32.totalorder %s19, 0
    %p198 = por %p196, %p197
    %p199 = scmp.le.s32.totalorder 1, %s13
    %p200 = scmp.lt.s32.totalorder %s13, 5
    %p201 = pnand %p199, %p200
    %p202 = pneg %p201
    // Predicated region
    $region9: #{linear_forward.1} parent=5 // pred_check
      _
    $region10: #{linear_forward.1} parent=5 // pred_check_branch
      %204 = sbr.rel (%p201) target = $region12
    $region11: #{linear_forward.1} parent=5 // pred_region
      %s205 = ssub.s32 %s13, 1
      // Predicated region
      $region13: #{linear_forward.1} parent=11 // pred_check
        %p206 = pneg %p60
      $region14: #{linear_forward.1} parent=11 // pred_check_branch
        %208 = sbr.rel (%p206) target = $region16
      $region15: #{linear_forward.1} parent=11 // pred_region
        _
      $region16: #{linear_forward.1} parent=11 // pred_fallthru
        _
      // Predicated region
      $region17: #{linear_forward.1} parent=11 // pred_check
        %p209 = pneg %p81
      $region18: #{linear_forward.1} parent=11 // pred_check_branch
        %211 = sbr.rel (%p209) target = $region20
      $region19: #{linear_forward.1} parent=11 // pred_region
        _
      $region20: #{linear_forward.1} parent=11 // pred_fallthru
        _
      // Predicated region
      $region21: #{linear_forward.1} parent=11 // pred_check
        %p212 = pneg %p102
      $region22: #{linear_forward.1} parent=11 // pred_check_branch
        %214 = sbr.rel (%p212) target = $region24
      $region23: #{linear_forward.1} parent=11 // pred_region
        _
      $region24: #{linear_forward.1} parent=11 // pred_fallthru
        _
      // Predicated region
      $region25: #{linear_forward.1} parent=11 // pred_check
        %p215 = pneg %p123
      $region26: #{linear_forward.1} parent=11 // pred_check_branch
        %217 = sbr.rel (%p215) target = $region28
      $region27: #{linear_forward.1} parent=11 // pred_region
        _
      $region28: #{linear_forward.1} parent=11 // pred_fallthru
        _
      // Predicated region
      $region29: #{linear_forward.1} parent=11 // pred_check
        %p218 = pneg %p144
      $region30: #{linear_forward.1} parent=11 // pred_check_branch
        %220 = sbr.rel (%p218) target = $region32
      $region31: #{linear_forward.1} parent=11 // pred_region
        _
      $region32: #{linear_forward.1} parent=11 // pred_fallthru
        _
      // Predicated region
      $region33: #{linear_forward.1} parent=11 // pred_check
        %p221 = pneg %p165
      $region34: #{linear_forward.1} parent=11 // pred_check_branch
        %223 = sbr.rel (%p221) target = $region36
      $region35: #{linear_forward.1} parent=11 // pred_region
        _
      $region36: #{linear_forward.1} parent=11 // pred_fallthru
        _
    $region12: #{linear_forward.1} parent=5 // pred_fallthru
      _
    %p224 = scmp.lt.s32.totalorder %s13, 4
    // Predicated region
    $region37: #{linear_forward.1} parent=5 // pred_check
      %p225 = pneg %p224
    $region38: #{linear_forward.1} parent=5 // pred_check_branch
      %227 = sbr.rel (%p225) target = $region40
    $region39: #{linear_forward.1} parent=5 // pred_region
      // Predicated region
      $region41: #{linear_forward.1} parent=39 // pred_check
        %p228 = pneg %p33
      $region42: #{linear_forward.1} parent=39 // pred_check_branch
        %230 = sbr.rel (%p228) target = $region44
      $region43: #{linear_forward.1} parent=39 // pred_region
        %s231 = smul.u32 2, %s13
        %p232 = scmp.lt.s32.totalorder %s231, 7
        %s233 = scalar_select %p232, %s231, 7
        %s234 = smul.addr %s233, 4
        %s235 = scalar_lea.vmem %s0, %s234
        %s236 = smul.u32 2, %s13
      $region44: #{linear_forward.1} parent=39 // pred_fallthru
        _
    $region40: #{linear_forward.1} parent=5 // pred_fallthru
      _
    %p237 = scmp.le.s32.totalorder 1, %s13
    %p238 = scmp.lt.s32.totalorder %s13, 5
    %p239 = pnand %p237, %p238
    %p240 = pneg %p239
    // Predicated region
    $region45: #{linear_forward.1} parent=5 // pred_check
      _
    $region46: #{linear_forward.1} parent=5 // pred_check_branch
      %242 = sbr.rel (%p239) target = $region48
    $region47: #{linear_forward.1} parent=5 // pred_region
      %s243 = ssub.s32 %s13, 1
      %s244 = smul.u32 2, %s18
      %p245 = scmp.lt.s32.totalorder %s244, 7
      %s246 = scalar_select %p245, %s244, 7
      %s247 = smul.addr %s246, 4
      %s248 = scalar_lea.vmem %s0, %s247
      %p249 = pneg %p39
      %p250 = pneg %p36
      %p251 = pneg %p60
      %p252 = pneg %p57
      %p253 = pneg %p81
      %p254 = pneg %p78
      %p255 = pneg %p102
      %p256 = pneg %p99
      %p257 = pneg %p123
      %p258 = pneg %p120
      %p259 = pneg %p144
      %p260 = pneg %p141
      %p261 = pneg %p165
      %p262 = pneg %p162
      %p263 = pneg %p191
      %p264 = pneg %p188
      %s265 = smul.u32 2, %s18
      %p266 = scmp.lt.s32.totalorder %s265, 7
      %s267 = scalar_select %p266, %s265, 7
      %s268 = smul.addr %s267, 4
      %s269 = scalar_lea.vmem %s7, %s268
      %s270 = smul.u32 2, %s18
      %p271 = scmp.lt.s32.totalorder %s270, 7
      %s272 = scalar_select %p271, %s270, 7
      %s273 = smul.addr %s272, 4
      %s274 = scalar_lea.vmem %s0, %s273
      %s275 = smul.u32 2, %s18
      %s276 = smul.u32 2, %s18
      %p277 = scmp.lt.s32.totalorder %s276, 7
      %s278 = scalar_select %p277, %s276, 7
      %s279 = smul.addr %s278, 4
      %s280 = scalar_lea.vmem %s7, %s279
      %s281 = smul.u32 2, %s18
      %v283 = vld [vmem:[%s274] sm:$0xf]
      %v284 = vld [vmem:[%s274 + $0x4] sm:$0xf]
      %v285 = vld [vmem:[%s1] sm:$0xf]
      %v286 = vld [vmem:[%s1 + $0x4] sm:$0xf]
      %v287 = vld [vmem:[%s1 + $0x8] sm:$0xf]
      %v288 = vld [vmem:[%s1 + $0xc] sm:$0xf]
      %v289 = vld [vmem:[%s2] sm:$0x1]
      %v291 = vperm.slane %v289, 0
      %v295 = vunpack.c.l.b16 %v283
      %v296 = vunpack.c.l.b16 %v284
      %v297 = vpack.c.b16 %v296, %v295
      %v302 = vunpack.c.l.b16 %v285
      %v303 = vunpack.c.l.b16 %v286
      %v304 = vunpack.c.l.b16 %v287
      %v305 = vunpack.c.l.b16 %v288
      %v306 = vpack.c.b16 %v303, %v302
      %v307 = vpack.c.b16 %v305, %v304
      %vm310 = vcmask 261120
      %v312 = vsel %vm310, %v297, 0
      %314 = vmatpush.bf16.msra.mxu0 0
      %315 = vmatpush.bf16.msra.mxu0 0
      %316 = vmatpush.bf16.msra.mxu0 0
      %317 = vmatpush.bf16.msra.mxu0 0
      %318 = vmatpush.bf16.msra.mxu0 0
      %319 = vmatpush.bf16.msra.mxu0 0
      %320 = vmatpush.bf16.msra.mxu0 %v307
      %321 = vmatpush.bf16.msra.mxu0 %v306
      %322 = vmatmul.bf16.gmra.mxu0 %v312
      %v323 = vpop.f32.mrf.mxu0
      %v324 = vadd.f32 %v291, %v323
      %v325 = vpop.f32.mrf.mxu0
      %v326 = vadd.f32 %v291, %v325
      %327 = vdwg.mxu0
      %v328 = vmax.f32 %v324, 0.0
      %v329 = vmax.f32 %v326, 0.0
      %v330 = vpack.c.bf16 %v329, %v328
      %v331 = vld [vmem:[%s3] sm:$0xf]
      %v332 = vld [vmem:[%s3 + $0x4] sm:$0xf]
      %v333 = vld [vmem:[%s3 + $0x8] sm:$0xf]
      %v334 = vld [vmem:[%s3 + $0xc] sm:$0xf]
      %v335 = vld [vmem:[%s3 + $0x10] sm:$0xf]
      %v336 = vld [vmem:[%s3 + $0x14] sm:$0xf]
      %v337 = vld [vmem:[%s3 + $0x18] sm:$0xf]
      %v338 = vld [vmem:[%s3 + $0x1c] sm:$0xf]
      %v339 = vld [vmem:[%s4] sm:$0x1]
      %v341 = vperm.slane %v339, 0
      %v351 = vunpack.c.l.b16 %v331
      %v352 = vunpack.c.l.b16 %v332
      %v353 = vunpack.c.l.b16 %v333
      %v354 = vunpack.c.l.b16 %v334
      %v355 = vunpack.c.l.b16 %v335
      %v356 = vunpack.c.l.b16 %v336
      %v357 = vunpack.c.l.b16 %v337
      %v358 = vunpack.c.l.b16 %v338
      %v359 = vpack.c.b16 %v352, %v351
      %v360 = vpack.c.b16 %v354, %v353
      %v361 = vpack.c.b16 %v356, %v355
      %v362 = vpack.c.b16 %v358, %v357
      %vm367 = vcmask 523264
      %v369 = vsel %vm367, %v330, 0
      %371 = vmatpush.bf16.msra.mxu0 0
      %372 = vmatpush.bf16.msra.mxu0 0
      %373 = vmatpush.bf16.msra.mxu0 0
      %374 = vmatpush.bf16.msra.mxu0 0
      %375 = vmatpush.bf16.msra.mxu0 %v362
      %376 = vmatpush.bf16.msra.mxu0 %v361
      %377 = vmatpush.bf16.msra.mxu0 %v360
      %378 = vmatpush.bf16.msra.mxu0 %v359
      %379 = vmatmul.bf16.gmra.mxu0 %v369
      %v380 = vpop.f32.mrf.mxu0
      %v381 = vadd.f32 %v341, %v380
      %v382 = vpop.f32.mrf.mxu0
      %v383 = vadd.f32 %v341, %v382
      %384 = vdwg.mxu0
      %v385 = vtanh.pop %v381
      %v386 = vtanh.pop %v383
      %v387 = vpack.c.bf16 %v386, %v385
      %v388 = vld [vmem:[%s5] sm:$0xf]
      %v389 = vld [vmem:[%s5 + $0x4] sm:$0xf]
      %v390 = vld [vmem:[%s5 + $0x8] sm:$0xf]
      %v391 = vld [vmem:[%s5 + $0xc] sm:$0xf]
      %v392 = vld [vmem:[%s5 + $0x10] sm:$0xf]
      %v393 = vld [vmem:[%s5 + $0x14] sm:$0xf]
      %v394 = vld [vmem:[%s6] sm:$0x1]
      %v396 = vperm.slane %v394, 0
      %v404 = vunpack.c.l.b16 %v388
      %v405 = vunpack.c.l.b16 %v389
      %v406 = vunpack.c.l.b16 %v390
      %v407 = vunpack.c.l.b16 %v391
      %v408 = vunpack.c.l.b16 %v392
      %v409 = vunpack.c.l.b16 %v393
      %v410 = vpack.c.b16 %v405, %v404
      %v411 = vpack.c.b16 %v407, %v406
      %v412 = vpack.c.b16 %v409, %v408
      %vm416 = vcmask 392192
      %v418 = vsel %vm416, %v387, 0
      %420 = vmatpush.bf16.msra.mxu0 0
      %421 = vmatpush.bf16.msra.mxu0 0
      %422 = vmatpush.bf16.msra.mxu0 0
      %423 = vmatpush.bf16.msra.mxu0 0
      %424 = vmatpush.bf16.msra.mxu0 0
      %425 = vmatpush.bf16.msra.mxu0 %v412
      %426 = vmatpush.bf16.msra.mxu0 %v411
      %427 = vmatpush.bf16.msra.mxu0 %v410
      %428 = vmatmul.bf16.gmra.mxu0 %v418
      %v429 = vpop.f32.mrf.mxu0
      %v430 = vadd.f32 %v396, %v429
      %v431 = vpop.f32.mrf.mxu0
      %v432 = vadd.f32 %v396, %v431
      %433 = vdwg.mxu0
      %v434 = vpack.c.bf16 %v430, %v430
      %v435 = vpack.c.bf16 %v432, %v432
      %vm436 = vcmask 125952
      %437 = vst.msk [vmem:[%s280] sm:$0xf] %vm436, %v434
      %438 = vst.msk [vmem:[%s280 + $0x4] sm:$0xf] %vm436, %v435
      %s439 = smul.u32 2, %s18
      %p440 = scmp.lt.s32.totalorder %s439, 7
      %s441 = scalar_select %p440, %s439, 7
      %s442 = smul.addr %s441, 4
      %s443 = scalar_lea.vmem %s7, %s442
      // Predicated region
      $region49: #{linear_forward.1} parent=47 // pred_check
        %p444 = pneg %p188
      $region50: #{linear_forward.1} parent=47 // pred_check_branch
        %446 = sbr.rel (%p444) target = $region52
      $region51: #{linear_forward.1} parent=47 // pred_region
        %s447 = smul.u32 2, %s18
      $region52: #{linear_forward.1} parent=47 // pred_fallthru
        _
    $region48: #{linear_forward.1} parent=5 // pred_fallthru
      _
    %p448 = scmp.le.s32.totalorder 2, %s13
    // Predicated region
    $region53: #{linear_forward.1} parent=5 // pred_check
      %p449 = pneg %p448
    $region54: #{linear_forward.1} parent=5 // pred_check_branch
      %451 = sbr.rel (%p449) target = $region56
    $region55: #{linear_forward.1} parent=5 // pred_region
      %s452 = ssub.s32 %s13, 2
      // Predicated region
      $region57: #{linear_forward.1} parent=55 // pred_check
        %p453 = pneg %p194
      $region58: #{linear_forward.1} parent=55 // pred_check_branch
        %455 = sbr.rel (%p453) target = $region60
      $region59: #{linear_forward.1} parent=55 // pred_region
        %s456 = smul.u32 2, %s19
        %p457 = scmp.lt.s32.totalorder %s456, 7
        %s458 = scalar_select %p457, %s456, 7
        %s459 = smul.addr %s458, 4
        %s460 = scalar_lea.vmem %s7, %s459
      $region60: #{linear_forward.1} parent=55 // pred_fallthru
        _
    $region56: #{linear_forward.1} parent=5 // pred_fallthru
      _
  $region6: #{linear_forward.1} parent=0 // loop_footer
    %s17 = sadd.s32 1, %s13
  $region7: #{linear_forward.1} parent=0 // loop_footer_branch
    %12 = sbr.rel target = $region3
  $region8: #{linear_forward.1} parent=0 // loop_exit
    _

</llo_original>
